<compile_context>
chip_gen: v7x
topology: tpu7x:2x2x1
jax: 0.10.0
libtpu: 0.0.40
codegen_flags: <defaults>
</compile_context>

<pallas_src>
import jax
import jax.numpy as jnp
from jax.experimental import pallas as pl
from jax.experimental.pallas import tpu as pltpu


# ----------------------------------------------------------------------------
# Kernels
# ----------------------------------------------------------------------------
def _dma_copy_kernel(x_ref, o_ref, sem):
    # Single HBM->HBM DMA of the whole (already reshape-viewed) array.
    cp = pltpu.make_async_copy(x_ref, o_ref, sem)
    cp.start()
    cp.wait()


def _tiled_copy_kernel(x_ref, o_ref):
    # One grid step moves one lane-dense (tile_rows, lane) slab through VMEM.
    # TODO(synk): fuse real per-element compute here when this scaffold is used.
    o_ref[...] = x_ref[...]


# ----------------------------------------------------------------------------
# Tiling selection (tiled path)
# ----------------------------------------------------------------------------
def _pick_tiling(n_elems, itemsize, *, target_bytes=4 << 20, min_steps=2):
    """Jointly pick (lane, tile_rows) for a flat copy of `n_elems` elements.

    lane      : multiple of 128 dividing n_elems (lane-dense stores).
    tile_rows : divisor of rows, multiple of the packed-sublane multiple,
                sized so each block is ~target_bytes and, for arrays larger
                than one tile, the grid has >= min_steps steps (v7x megacore).
    Returns (None, None) if no valid tiling exists (caller falls back to DMA).
    """
    sublane_mult = 8 * max(1, 4 // max(1, itemsize))   # 8 f32, 16 bf16, 32 i8/fp8
    total_bytes = n_elems * itemsize

    for lane in (4096, 2048, 1024, 512, 256, 128):
        if n_elems % lane:
            continue
        rows = n_elems // lane
        row_bytes = lane * itemsize

        # Small arrays: one full-extent block ((8,128) rule satisfied by the
        # full dims) -- a single step of at most one target-sized tile.
        if total_bytes <= target_bytes:
            return lane, rows

        # Otherwise stay in the tiled, double-buffered regime with >= min_steps
        # grid steps and blocks of ~target_bytes.
        max_rows = min(target_bytes // row_bytes, rows // min_steps)
        max_rows = (max_rows // sublane_mult) * sublane_mult
        if max_rows < sublane_mult:
            continue

        r = max_rows
        while r >= sublane_mult:
            if rows % r == 0:
                return lane, r
            r -= sublane_mult

    return None, None


# ----------------------------------------------------------------------------
# pallas_call wrappers
# ----------------------------------------------------------------------------
def _dma_copy(x_viewed, nbytes):
    """Single HBM->HBM DMA copy; x_viewed already has the output shape."""
    return pl.pallas_call(
        _dma_copy_kernel,
        out_shape=jax.ShapeDtypeStruct(x_viewed.shape, x_viewed.dtype),
        in_specs=[pl.BlockSpec(memory_space=pl.ANY)],
        out_specs=pl.BlockSpec(memory_space=pl.ANY),
        scratch_shapes=[pltpu.SemaphoreType.DMA(())],
        compiler_params=pltpu.CompilerParams(has_side_effects=True),
        cost_estimate=pl.CostEstimate(
            flops=0, transcendentals=0, bytes_accessed=2 * nbytes
        ),
    )(x_viewed)


def _tiled_copy(x_flat2d, lane, tile_rows, nbytes):
    """Lane-dense VMEM-staged copy over a 1-D 'parallel' grid."""
    rows = x_flat2d.shape[0]
    return pl.pallas_call(
        _tiled_copy_kernel,
        out_shape=jax.ShapeDtypeStruct((rows, lane), x_flat2d.dtype),
        grid=(rows // tile_rows,),
        in_specs=[pl.BlockSpec((tile_rows, lane), lambda i: (i, 0))],
        out_specs=pl.BlockSpec((tile_rows, lane), lambda i: (i, 0)),
        compiler_params=pltpu.CompilerParams(
            dimension_semantics=("parallel",),
            # Explicit scoped-VMEM limit: 4 MiB tiles x 2 bufs x (in+out) =
            # 16 MiB, safe with headroom on v5e/v6e/v7x once the limit is 32 MiB.
            vmem_limit_bytes=32 << 20,
        ),
        cost_estimate=pl.CostEstimate(
            flops=0, transcendentals=0, bytes_accessed=2 * nbytes
        ),
        # TODO(synk): pass input_output_aliases={0: 0} when the caller donates x
        # (halves peak HBM footprint for this semantically in-place identity).
    )(x_flat2d)


# ----------------------------------------------------------------------------
# Public op
# ----------------------------------------------------------------------------
def temporal_aggregation_cat(x, K, *, use_pallas=True, impl="dma",
                             small_bytes=1 << 20):
    """x: (B*K, C, H, W) -> (B, K*C, H, W), identical to torch's contiguous .view().

    use_pallas=False            -> metadata-only reshape (preferred in production).
    use_pallas=True, impl="dma" -> single HBM->HBM DMA copy (fastest physical copy).
    use_pallas=True, impl="tiled" -> lane-dense VMEM-staged copy (fusion scaffold).
    Inputs smaller than `small_bytes` always take the free reshape; pass
    small_bytes=0 to force the Pallas path (e.g. for testing).
    """
    BK, C, H, W = x.shape
    assert BK % K == 0, "batch dim must be divisible by K"
    B = BK // K
    out_shape = (B, K * C, H, W)

    n_elems = B * K * C * H * W
    itemsize = jnp.dtype(x.dtype).itemsize
    nbytes = n_elems * itemsize

    # The op is a byte-identical view; a physical copy is only worth it when
    # compute will be fused into the kernel.  Small inputs: always the view.
    if not use_pallas or nbytes < small_bytes:
        return jnp.reshape(x, out_shape)

    if impl == "tiled":
        lane, tile_rows = _pick_tiling(n_elems, itemsize)
        if lane is not None:
            x2 = jnp.reshape(x, (n_elems // lane, lane))   # metadata-only
            y2 = _tiled_copy(x2, lane, tile_rows, nbytes)
            return jnp.reshape(y2, out_shape)              # metadata-only
        # No lane-dense tiling exists for this shape: fall through to DMA.

    # impl == "dma" (default) and the fallback for awkward shapes.
    x_viewed = jnp.reshape(x, out_shape)                   # metadata-only
    return _dma_copy(x_viewed, nbytes)


# ----------------------------------------------------------------------------
# Self-test
# ----------------------------------------------------------------------------
if __name__ == "__main__":
    K = 4
    B, C, H, W = 2, 4, 16, 16          # module input has B*K samples

    key = jax.random.PRNGKey(0)
    x = jax.random.normal(key, (B * K, C, H, W), dtype=jnp.float32)

    # Reference: exact semantics of torch's contiguous .view()
    y_ref = jnp.reshape(x, (B, K * C, H, W))

    # 1) HBM->HBM DMA path (forced past the small-N guard).
    y_dma = temporal_aggregation_cat(x, K, use_pallas=True, impl="dma",
                                     small_bytes=0)
    y_dma = jax.block_until_ready(y_dma)
    assert y_dma.shape == (B, K * C, H, W), y_dma.shape
    assert y_dma.dtype == x.dtype
    assert jnp.array_equal(y_dma, y_ref), "DMA path mismatch vs. reshape reference"

    # 2) Tiled VMEM-staged path (forced past the small-N guard).
    y_tiled = temporal_aggregation_cat(x, K, use_pallas=True, impl="tiled",
                                       small_bytes=0)
    y_tiled = jax.block_until_ready(y_tiled)
    assert y_tiled.shape == (B, K * C, H, W), y_tiled.shape
    assert y_tiled.dtype == x.dtype
    assert jnp.array_equal(y_tiled, y_ref), "tiled path mismatch vs. reshape reference"

    # 3) Default production path: small-N guard returns the free view.
    y_view = temporal_aggregation_cat(x, K)
    y_view = jax.block_until_ready(y_view)
    assert jnp.array_equal(y_view, y_ref)

    print("KERNEL_OK")
</pallas_src>

<mosaic_0001>
module attributes {stable_mosaic.version = 11 : i64} {
  func.func @_dma_copy_kernel(%arg0: memref<2x16x16x16xf32, #tpu.memory_space<any>>, %arg1: memref<2x16x16x16xf32, #tpu.memory_space<any>>, %arg2: memref<!tpu.dma_semaphore, #tpu.memory_space<semaphore_mem>>) attributes {dimension_semantics = [], scalar_prefetch = 0 : i64, scratch_operands = 1 : i64, tpu.core_type = #tpu.core_type<tc>} {
    tpu.enqueue_dma source(%arg0 : memref<2x16x16x16xf32, #tpu.memory_space<any>>) target(%arg1 : memref<2x16x16x16xf32, #tpu.memory_space<any>>) target_semaphore(%arg2 : memref<!tpu.dma_semaphore, #tpu.memory_space<semaphore_mem>>)
    tpu.wait_dma2 semaphore(%arg2 : memref<!tpu.dma_semaphore, #tpu.memory_space<semaphore_mem>>) src(%arg0 : memref<2x16x16x16xf32, #tpu.memory_space<any>>) dst(%arg1 : memref<2x16x16x16xf32, #tpu.memory_space<any>>)
    return
  }
}

</mosaic_0001>

<llo_original>
// kernel: tpu_custom_call.1
$region0: #{tpu_custom_call.1}
  #allocation0 [shape = 'u32[]', space=smem, size = 0x4, offset = 0x4, fixed_abs, tag = 'smem constant byte address 0x4 - core index']
  #allocation1 [shape = 'u32[144,128]{1,0:T(1,128)}', space=vmem, size = 0x12000, scoped, tag = 'internal scratch']
  #allocation2 [shape = 's32[1]{0}', space=sflag, size = 0x4, scoped, tag = 'scratch operand']
  #allocation3 [shape = 's32[]', space=sflag, size = 0x4, offset = 0, fixed_abs, tag = 'sflag constant byte address 0x0 - dummy sync flag']
  #allocation4 [shape = 'u32[0]{0}', space=smem, size = 0, offset = 0, fixed_abs, tag = 'smem constant byte address 0x0 - null']
  %s0 = inlined_call_operand.hbm [shape: f32[2,16,16,16], index: 0, kind: input, shape index: {}]
  %s1 = inlined_call_operand.hbm [shape: f32[2,16,16,16], index: 1, kind: output, shape index: {}]
  %s2 = sld [smem:[#allocation0]]
  $region2: #{tpu_custom_call.1} parent=0
    _
  %s4 = ssub.s32 1, %s2
  %s5 = scalar_select 0, %s4, %s2
  %s7 = sshll.u32 1, 14
  %s8 = sxor.u32 4294967295, %s7
  %s11 = sshll.u32 3, 24
  %s12 = sxor.u32 4294967295, %s11
  %s13 = sand.u32 0, %s12
  %s15 = sor.u32 %s13, 0
  %18 = dma.general %s0, 8192, %s1, [#allocation2], [#allocation3], [#allocation4], %s15, 0
  %s19 = smul.u32 2, 16
  %s20 = smul.u32 %s19, 16
  %s21 = smul.u32 %s20, 1
  %s22 = sshll.u32 %s21, 4
  %23 = dma.done [#allocation2], %s22
  %24 = vsyncmov [#allocation2]
  %s25 = vpop.sfrf %24
  %p26 = scmp.eq.s32.totalorder %s25, 0
  %p27 = pneg %p26
  %29 = shalt.err (%p27)

</llo_original>
